<compile_context>
chip_gen: v7x
topology: tpu7x:2x2x1
jax: 0.10.0
libtpu: 0.0.40
codegen_flags: <defaults>
</compile_context>

<pallas_src>
import functools

import jax
import jax.numpy as jnp
from jax.experimental import pallas as pl
from jax.experimental.pallas import tpu as pltpu


def _round_up(x, m):
    return (x + m - 1) // m * m


def _gaussian_smearing_kernel(dist_ref, offset_ref, out_ref, *, coeff):
    d = dist_ref[...]            # (tile_n, 1)  f32
    off = offset_ref[...]        # (1, G)       f32
    diff = d - off               # broadcast -> (tile_n, G), VPU
    out_ref[...] = jnp.exp(coeff * diff * diff)   # exp runs on the EUP


def gaussian_smearing(dist, offset, coeff, *, row_tile=1024):
    """exp(coeff * (dist.reshape(-1,1) - offset.reshape(1,-1))**2) via Pallas."""
    n = int(dist.size)
    g = int(offset.shape[0])

    d = dist.reshape(n).astype(jnp.float32)
    # Row tiling: sublane multiple of 8; a single block when everything fits.
    tile = min(row_tile, _round_up(n, 8))
    tile = _round_up(tile, 8)
    n_pad = _round_up(n, tile)
    if n_pad != n:
        d = jnp.pad(d, (0, n_pad - n))
    d2 = d.reshape(n_pad, 1)
    off2 = offset.astype(jnp.float32).reshape(1, g)

    out = pl.pallas_call(
        functools.partial(_gaussian_smearing_kernel, coeff=float(coeff)),
        out_shape=jax.ShapeDtypeStruct((n_pad, g), jnp.float32),
        grid=(n_pad // tile,),
        in_specs=[
            pl.BlockSpec((tile, 1), lambda i: (i, 0)),   # distances (row tile)
            pl.BlockSpec((1, g), lambda i: (0, 0)),      # offsets, VMEM-resident
        ],
        out_specs=pl.BlockSpec((tile, g), lambda i: (i, 0)),
        compiler_params=pltpu.CompilerParams(
            dimension_semantics=("parallel",)),
    )(d2, off2)
    return out[:n]


class GaussianSmearing:
    """Mirror of the PyTorch module (forward semantics; buffers held in JAX)."""

    def __init__(self, start=0.0, stop=10.0, num_gaussians=50):
        self.offset = jnp.linspace(start, stop, num_gaussians, dtype=jnp.float32)
        # matches -0.5 / (offset[1] - offset[0]).item() ** 2 (exact linspace step)
        step = (stop - start) / (num_gaussians - 1)
        self.coeff = -0.5 / step ** 2
        # TODO(synk): device='cuda' / register_buffer are PyTorch bookkeeping
        # with no Pallas equivalent; arrays simply live on the default device.

    def __call__(self, dist):
        return gaussian_smearing(dist, self.offset, self.coeff)


if __name__ == "__main__":
    key = jax.random.PRNGKey(0)
    B, E = 2, 128                 # e.g. 2 molecules x 128 pairwise distances
    NUM_G = 50
    dist = jax.random.uniform(key, (B, E), jnp.float32, minval=0.0, maxval=10.0)

    module = GaussianSmearing(start=0.0, stop=10.0, num_gaussians=NUM_G)
    out = module(dist)
    out = jax.block_until_ready(out)

    assert out.shape == (B * E, NUM_G)
    ref = jnp.exp(module.coeff *
                  (dist.reshape(-1, 1) - module.offset.reshape(1, -1)) ** 2)
    assert bool(jnp.all(jnp.isfinite(out)))
    assert bool(jnp.allclose(out, ref, atol=1e-5, rtol=1e-5))
    print("KERNEL_OK")
</pallas_src>

<mosaic_0001>
module attributes {stable_mosaic.version = 11 : i64} {
  func.func @_gaussian_smearing_kernel(%arg0: i32, %arg1: memref<256x1xf32, #tpu.memory_space<vmem>>, %arg2: memref<1x50xf32, #tpu.memory_space<vmem>>, %arg3: memref<256x50xf32, #tpu.memory_space<vmem>>) attributes {dimension_semantics = [#tpu.dimension_semantics<parallel>], iteration_bounds = array<i64: 1>, scalar_prefetch = 0 : i64, scratch_operands = 0 : i64, tpu.core_type = #tpu.core_type<tc>, window_params = [{transform_indices = @transform_0, window_bounds = array<i64: 256, 1>}, {pipeline_mode = #tpu.pipeline_mode<synchronous>, transform_indices = @transform_1, window_bounds = array<i64: 1, 50>}, {transform_indices = @transform_2, window_bounds = array<i64: 256, 50>}]} {
    %c0 = arith.constant 0 : index
    %c0_0 = arith.constant 0 : index
    %0 = vector.load %arg1[%c0, %c0_0] : memref<256x1xf32, #tpu.memory_space<vmem>>, vector<256x1xf32>
    %c0_1 = arith.constant 0 : index
    %c0_2 = arith.constant 0 : index
    %1 = vector.load %arg2[%c0_1, %c0_2] : memref<1x50xf32, #tpu.memory_space<vmem>>, vector<1x50xf32>
    %2 = vector.broadcast %0 : vector<256x1xf32> to vector<256x50xf32>
    %3 = vector.broadcast %1 : vector<1x50xf32> to vector<256x50xf32>
    %4 = arith.subf %2, %3 : vector<256x50xf32>
    %cst = arith.constant -1.200500e+01 : f32
    %5 = vector.broadcast %cst : f32 to vector<256x50xf32>
    %6 = arith.mulf %5, %4 : vector<256x50xf32>
    %7 = arith.mulf %6, %4 : vector<256x50xf32>
    %8 = math.exp %7 : vector<256x50xf32>
    %c0_3 = arith.constant 0 : index
    %c0_4 = arith.constant 0 : index
    %9 = vector.load %arg3[%c0_3, %c0_4] : memref<256x50xf32, #tpu.memory_space<vmem>>, vector<256x50xf32>
    tpu.vector_store %arg3[%c0_3, %c0_4], %8 {strides = array<i32>} : memref<256x50xf32, #tpu.memory_space<vmem>>, vector<256x50xf32>,
    return
  }
  func.func @transform_0(%arg0: i32) -> (i32, i32) {
    %c0_i32 = arith.constant 0 : i32
    %c0_i32_0 = arith.constant 0 : i32
    return %arg0, %c0_i32 : i32, i32
  }
  func.func @transform_1(%arg0: i32) -> (i32, i32) {
    %c0_i32 = arith.constant 0 : i32
    %c0_i32_0 = arith.constant 0 : i32
    %c0_i32_1 = arith.constant 0 : i32
    return %c0_i32, %c0_i32_0 : i32, i32
  }
  func.func @transform_2(%arg0: i32) -> (i32, i32) {
    %c0_i32 = arith.constant 0 : i32
    %c0_i32_0 = arith.constant 0 : i32
    return %arg0, %c0_i32 : i32, i32
  }
}

</mosaic_0001>

<llo_original>
// kernel: tpu_custom_call.1
$region0: #{tpu_custom_call.1}
  #allocation0 [shape = 'u32[]', space=smem, size = 0x4, offset = 0x4, fixed_abs, tag = 'smem constant byte address 0x4 - core index']
  #allocation1 [shape = 'u32[144,128]{1,0:T(1,128)}', space=vmem, size = 0x12000, scoped, tag = 'internal scratch']
  %s0 = inlined_call_operand.vmem [shape: f32[256,1], index: 0, kind: input, shape index: {}]
  %s1 = inlined_call_operand.vmem [shape: f32[1,50], index: 1, kind: input, shape index: {}]
  %s2 = inlined_call_operand.vmem [shape: f32[256,50], index: 2, kind: output, shape index: {}]
  %s3 = sld [smem:[#allocation0]]
  $region18: #{tpu_custom_call.1} parent=0
    _
  %s5 = ssub.s32 1, %s3
  %s6 = scalar_select 0, %s5, %s3
  // Predicated region
  $region2: #{tpu_custom_call.1} parent=0 // pred_check
    _
  $region3: #{tpu_custom_call.1} parent=0 // pred_check_branch
    %8 = sbr.rel (0) target = $region5
  $region4: #{tpu_custom_call.1} parent=0 // pred_region
    _
  $region5: #{tpu_custom_call.1} parent=0 // pred_fallthru
    _
  // Predicated region
  $region6: #{tpu_custom_call.1} parent=0 // pred_check
    _
  $region7: #{tpu_custom_call.1} parent=0 // pred_check_branch
    %10 = sbr.rel (0) target = $region9
  $region8: #{tpu_custom_call.1} parent=0 // pred_region
    _
  $region9: #{tpu_custom_call.1} parent=0 // pred_fallthru
    _
  %v11 = vld [vmem:[%s0] sm:$0xff]
  %v12 = vld [vmem:[%s0 + $0x8] sm:$0xff]
  %v13 = vld [vmem:[%s0 + $0x10] sm:$0xff]
  %v14 = vld [vmem:[%s0 + $0x18] sm:$0xff]
  %v15 = vld [vmem:[%s0 + $0x20] sm:$0xff]
  %v16 = vld [vmem:[%s0 + $0x28] sm:$0xff]
  %v17 = vld [vmem:[%s0 + $0x30] sm:$0xff]
  %v18 = vld [vmem:[%s0 + $0x38] sm:$0xff]
  %v19 = vld [vmem:[%s0 + $0x40] sm:$0xff]
  %v20 = vld [vmem:[%s0 + $0x48] sm:$0xff]
  %v21 = vld [vmem:[%s0 + $0x50] sm:$0xff]
  %v22 = vld [vmem:[%s0 + $0x58] sm:$0xff]
  %v23 = vld [vmem:[%s0 + $0x60] sm:$0xff]
  %v24 = vld [vmem:[%s0 + $0x68] sm:$0xff]
  %v25 = vld [vmem:[%s0 + $0x70] sm:$0xff]
  %v26 = vld [vmem:[%s0 + $0x78] sm:$0xff]
  %v27 = vld [vmem:[%s0 + $0x80] sm:$0xff]
  %v28 = vld [vmem:[%s0 + $0x88] sm:$0xff]
  %v29 = vld [vmem:[%s0 + $0x90] sm:$0xff]
  %v30 = vld [vmem:[%s0 + $0x98] sm:$0xff]
  %v31 = vld [vmem:[%s0 + $0xa0] sm:$0xff]
  %v32 = vld [vmem:[%s0 + $0xa8] sm:$0xff]
  %v33 = vld [vmem:[%s0 + $0xb0] sm:$0xff]
  %v34 = vld [vmem:[%s0 + $0xb8] sm:$0xff]
  %v35 = vld [vmem:[%s0 + $0xc0] sm:$0xff]
  %v36 = vld [vmem:[%s0 + $0xc8] sm:$0xff]
  %v37 = vld [vmem:[%s0 + $0xd0] sm:$0xff]
  %v38 = vld [vmem:[%s0 + $0xd8] sm:$0xff]
  %v39 = vld [vmem:[%s0 + $0xe0] sm:$0xff]
  %v40 = vld [vmem:[%s0 + $0xe8] sm:$0xff]
  %v41 = vld [vmem:[%s0 + $0xf0] sm:$0xff]
  %v42 = vld [vmem:[%s0 + $0xf8] sm:$0xff]
  %v43 = vld [vmem:[%s1] sm:$0x1]
  %45 = vset.pattern.permute.xlu0 0
  %46 = vperm.xlu0 %45, %v11
  %v47 = vpop.permute.xlu0 %46
  %50 = vset.pattern.permute.xlu0 0
  %51 = vperm.xlu0 %50, %v12
  %v52 = vpop.permute.xlu0 %51
  %55 = vset.pattern.permute.xlu0 0
  %56 = vperm.xlu0 %55, %v13
  %v57 = vpop.permute.xlu0 %56
  %60 = vset.pattern.permute.xlu0 0
  %61 = vperm.xlu0 %60, %v14
  %v62 = vpop.permute.xlu0 %61
  %65 = vset.pattern.permute.xlu0 0
  %66 = vperm.xlu0 %65, %v15
  %v67 = vpop.permute.xlu0 %66
  %70 = vset.pattern.permute.xlu0 0
  %71 = vperm.xlu0 %70, %v16
  %v72 = vpop.permute.xlu0 %71
  %75 = vset.pattern.permute.xlu0 0
  %76 = vperm.xlu0 %75, %v17
  %v77 = vpop.permute.xlu0 %76
  %80 = vset.pattern.permute.xlu0 0
  %81 = vperm.xlu0 %80, %v18
  %v82 = vpop.permute.xlu0 %81
  %85 = vset.pattern.permute.xlu0 0
  %86 = vperm.xlu0 %85, %v19
  %v87 = vpop.permute.xlu0 %86
  %90 = vset.pattern.permute.xlu0 0
  %91 = vperm.xlu0 %90, %v20
  %v92 = vpop.permute.xlu0 %91
  %95 = vset.pattern.permute.xlu0 0
  %96 = vperm.xlu0 %95, %v21
  %v97 = vpop.permute.xlu0 %96
  %100 = vset.pattern.permute.xlu0 0
  %101 = vperm.xlu0 %100, %v22
  %v102 = vpop.permute.xlu0 %101
  %105 = vset.pattern.permute.xlu0 0
  %106 = vperm.xlu0 %105, %v23
  %v107 = vpop.permute.xlu0 %106
  %110 = vset.pattern.permute.xlu0 0
  %111 = vperm.xlu0 %110, %v24
  %v112 = vpop.permute.xlu0 %111
  %115 = vset.pattern.permute.xlu0 0
  %116 = vperm.xlu0 %115, %v25
  %v117 = vpop.permute.xlu0 %116
  %120 = vset.pattern.permute.xlu0 0
  %121 = vperm.xlu0 %120, %v26
  %v122 = vpop.permute.xlu0 %121
  %125 = vset.pattern.permute.xlu0 0
  %126 = vperm.xlu0 %125, %v27
  %v127 = vpop.permute.xlu0 %126
  %130 = vset.pattern.permute.xlu0 0
  %131 = vperm.xlu0 %130, %v28
  %v132 = vpop.permute.xlu0 %131
  %135 = vset.pattern.permute.xlu0 0
  %136 = vperm.xlu0 %135, %v29
  %v137 = vpop.permute.xlu0 %136
  %140 = vset.pattern.permute.xlu0 0
  %141 = vperm.xlu0 %140, %v30
  %v142 = vpop.permute.xlu0 %141
  %145 = vset.pattern.permute.xlu0 0
  %146 = vperm.xlu0 %145, %v31
  %v147 = vpop.permute.xlu0 %146
  %150 = vset.pattern.permute.xlu0 0
  %151 = vperm.xlu0 %150, %v32
  %v152 = vpop.permute.xlu0 %151
  %155 = vset.pattern.permute.xlu0 0
  %156 = vperm.xlu0 %155, %v33
  %v157 = vpop.permute.xlu0 %156
  %160 = vset.pattern.permute.xlu0 0
  %161 = vperm.xlu0 %160, %v34
  %v162 = vpop.permute.xlu0 %161
  %165 = vset.pattern.permute.xlu0 0
  %166 = vperm.xlu0 %165, %v35
  %v167 = vpop.permute.xlu0 %166
  %170 = vset.pattern.permute.xlu0 0
  %171 = vperm.xlu0 %170, %v36
  %v172 = vpop.permute.xlu0 %171
  %175 = vset.pattern.permute.xlu0 0
  %176 = vperm.xlu0 %175, %v37
  %v177 = vpop.permute.xlu0 %176
  %180 = vset.pattern.permute.xlu0 0
  %181 = vperm.xlu0 %180, %v38
  %v182 = vpop.permute.xlu0 %181
  %185 = vset.pattern.permute.xlu0 0
  %186 = vperm.xlu0 %185, %v39
  %v187 = vpop.permute.xlu0 %186
  %190 = vset.pattern.permute.xlu0 0
  %191 = vperm.xlu0 %190, %v40
  %v192 = vpop.permute.xlu0 %191
  %195 = vset.pattern.permute.xlu0 0
  %196 = vperm.xlu0 %195, %v41
  %v197 = vpop.permute.xlu0 %196
  %200 = vset.pattern.permute.xlu0 0
  %201 = vperm.xlu0 %200, %v42
  %v202 = vpop.permute.xlu0 %201
  %v205 = vlaneseq
  %v206 = vshrl.u32 %v205, 7
  %v207 = vsub.s32 0, %v206
  %v208 = vrot.slane %v43, %v207
  %v210 = vsub.f32 %v47, %v208
  %v211 = vsub.f32 %v52, %v208
  %v212 = vsub.f32 %v57, %v208
  %v213 = vsub.f32 %v62, %v208
  %v214 = vsub.f32 %v67, %v208
  %v215 = vsub.f32 %v72, %v208
  %v216 = vsub.f32 %v77, %v208
  %v217 = vsub.f32 %v82, %v208
  %v218 = vsub.f32 %v87, %v208
  %v219 = vsub.f32 %v92, %v208
  %v220 = vsub.f32 %v97, %v208
  %v221 = vsub.f32 %v102, %v208
  %v222 = vsub.f32 %v107, %v208
  %v223 = vsub.f32 %v112, %v208
  %v224 = vsub.f32 %v117, %v208
  %v225 = vsub.f32 %v122, %v208
  %v226 = vsub.f32 %v127, %v208
  %v227 = vsub.f32 %v132, %v208
  %v228 = vsub.f32 %v137, %v208
  %v229 = vsub.f32 %v142, %v208
  %v230 = vsub.f32 %v147, %v208
  %v231 = vsub.f32 %v152, %v208
  %v232 = vsub.f32 %v157, %v208
  %v233 = vsub.f32 %v162, %v208
  %v234 = vsub.f32 %v167, %v208
  %v235 = vsub.f32 %v172, %v208
  %v236 = vsub.f32 %v177, %v208
  %v237 = vsub.f32 %v182, %v208
  %v238 = vsub.f32 %v187, %v208
  %v239 = vsub.f32 %v192, %v208
  %v240 = vsub.f32 %v197, %v208
  %v241 = vsub.f32 %v202, %v208
  %v242 = vmul.f32 %v210, -12.005
  %v243 = vmul.f32 %v211, -12.005
  %v244 = vmul.f32 %v212, -12.005
  %v245 = vmul.f32 %v213, -12.005
  %v246 = vmul.f32 %v214, -12.005
  %v247 = vmul.f32 %v215, -12.005
  %v248 = vmul.f32 %v216, -12.005
  %v249 = vmul.f32 %v217, -12.005
  %v250 = vmul.f32 %v218, -12.005
  %v251 = vmul.f32 %v219, -12.005
  %v252 = vmul.f32 %v220, -12.005
  %v253 = vmul.f32 %v221, -12.005
  %v254 = vmul.f32 %v222, -12.005
  %v255 = vmul.f32 %v223, -12.005
  %v256 = vmul.f32 %v224, -12.005
  %v257 = vmul.f32 %v225, -12.005
  %v258 = vmul.f32 %v226, -12.005
  %v259 = vmul.f32 %v227, -12.005
  %v260 = vmul.f32 %v228, -12.005
  %v261 = vmul.f32 %v229, -12.005
  %v262 = vmul.f32 %v230, -12.005
  %v263 = vmul.f32 %v231, -12.005
  %v264 = vmul.f32 %v232, -12.005
  %v265 = vmul.f32 %v233, -12.005
  %v266 = vmul.f32 %v234, -12.005
  %v267 = vmul.f32 %v235, -12.005
  %v268 = vmul.f32 %v236, -12.005
  %v269 = vmul.f32 %v237, -12.005
  %v270 = vmul.f32 %v238, -12.005
  %v271 = vmul.f32 %v239, -12.005
  %v272 = vmul.f32 %v240, -12.005
  %v273 = vmul.f32 %v241, -12.005
  %v274 = vmul.f32 %v242, %v210
  %v275 = vmul.f32 %v243, %v211
  %v276 = vmul.f32 %v244, %v212
  %v277 = vmul.f32 %v245, %v213
  %v278 = vmul.f32 %v246, %v214
  %v279 = vmul.f32 %v247, %v215
  %v280 = vmul.f32 %v248, %v216
  %v281 = vmul.f32 %v249, %v217
  %v282 = vmul.f32 %v250, %v218
  %v283 = vmul.f32 %v251, %v219
  %v284 = vmul.f32 %v252, %v220
  %v285 = vmul.f32 %v253, %v221
  %v286 = vmul.f32 %v254, %v222
  %v287 = vmul.f32 %v255, %v223
  %v288 = vmul.f32 %v256, %v224
  %v289 = vmul.f32 %v257, %v225
  %v290 = vmul.f32 %v258, %v226
  %v291 = vmul.f32 %v259, %v227
  %v292 = vmul.f32 %v260, %v228
  %v293 = vmul.f32 %v261, %v229
  %v294 = vmul.f32 %v262, %v230
  %v295 = vmul.f32 %v263, %v231
  %v296 = vmul.f32 %v264, %v232
  %v297 = vmul.f32 %v265, %v233
  %v298 = vmul.f32 %v266, %v234
  %v299 = vmul.f32 %v267, %v235
  %v300 = vmul.f32 %v268, %v236
  %v301 = vmul.f32 %v269, %v237
  %v302 = vmul.f32 %v270, %v238
  %v303 = vmul.f32 %v271, %v239
  %v304 = vmul.f32 %v272, %v240
  %v305 = vmul.f32 %v273, %v241
  %v306 = vmul.f32 %v274, 1.442695
  %v307 = vpow.pop %v306
  %v308 = vmul.f32 %v275, 1.442695
  %v309 = vpow.pop %v308
  %v310 = vmul.f32 %v276, 1.442695
  %v311 = vpow.pop %v310
  %v312 = vmul.f32 %v277, 1.442695
  %v313 = vpow.pop %v312
  %v314 = vmul.f32 %v278, 1.442695
  %v315 = vpow.pop %v314
  %v316 = vmul.f32 %v279, 1.442695
  %v317 = vpow.pop %v316
  %v318 = vmul.f32 %v280, 1.442695
  %v319 = vpow.pop %v318
  %v320 = vmul.f32 %v281, 1.442695
  %v321 = vpow.pop %v320
  %v322 = vmul.f32 %v282, 1.442695
  %v323 = vpow.pop %v322
  %v324 = vmul.f32 %v283, 1.442695
  %v325 = vpow.pop %v324
  %v326 = vmul.f32 %v284, 1.442695
  %v327 = vpow.pop %v326
  %v328 = vmul.f32 %v285, 1.442695
  %v329 = vpow.pop %v328
  %v330 = vmul.f32 %v286, 1.442695
  %v331 = vpow.pop %v330
  %v332 = vmul.f32 %v287, 1.442695
  %v333 = vpow.pop %v332
  %v334 = vmul.f32 %v288, 1.442695
  %v335 = vpow.pop %v334
  %v336 = vmul.f32 %v289, 1.442695
  %v337 = vpow.pop %v336
  %v338 = vmul.f32 %v290, 1.442695
  %v339 = vpow.pop %v338
  %v340 = vmul.f32 %v291, 1.442695
  %v341 = vpow.pop %v340
  %v342 = vmul.f32 %v292, 1.442695
  %v343 = vpow.pop %v342
  %v344 = vmul.f32 %v293, 1.442695
  %v345 = vpow.pop %v344
  %v346 = vmul.f32 %v294, 1.442695
  %v347 = vpow.pop %v346
  %v348 = vmul.f32 %v295, 1.442695
  %v349 = vpow.pop %v348
  %v350 = vmul.f32 %v296, 1.442695
  %v351 = vpow.pop %v350
  %v352 = vmul.f32 %v297, 1.442695
  %v353 = vpow.pop %v352
  %v354 = vmul.f32 %v298, 1.442695
  %v355 = vpow.pop %v354
  %v356 = vmul.f32 %v299, 1.442695
  %v357 = vpow.pop %v356
  %v358 = vmul.f32 %v300, 1.442695
  %v359 = vpow.pop %v358
  %v360 = vmul.f32 %v301, 1.442695
  %v361 = vpow.pop %v360
  %v362 = vmul.f32 %v302, 1.442695
  %v363 = vpow.pop %v362
  %v364 = vmul.f32 %v303, 1.442695
  %v365 = vpow.pop %v364
  %v366 = vmul.f32 %v304, 1.442695
  %v367 = vpow.pop %v366
  %v368 = vmul.f32 %v305, 1.442695
  %v369 = vpow.pop %v368
  %vm370 = vcmask 408576
  %371 = vst.msk [vmem:[%s2] sm:$0xff] %vm370, %v307
  %372 = vst.msk [vmem:[%s2 + $0x8] sm:$0xff] %vm370, %v309
  %373 = vst.msk [vmem:[%s2 + $0x10] sm:$0xff] %vm370, %v311
  %374 = vst.msk [vmem:[%s2 + $0x18] sm:$0xff] %vm370, %v313
  %375 = vst.msk [vmem:[%s2 + $0x20] sm:$0xff] %vm370, %v315
  %376 = vst.msk [vmem:[%s2 + $0x28] sm:$0xff] %vm370, %v317
  %377 = vst.msk [vmem:[%s2 + $0x30] sm:$0xff] %vm370, %v319
  %378 = vst.msk [vmem:[%s2 + $0x38] sm:$0xff] %vm370, %v321
  %379 = vst.msk [vmem:[%s2 + $0x40] sm:$0xff] %vm370, %v323
  %380 = vst.msk [vmem:[%s2 + $0x48] sm:$0xff] %vm370, %v325
  %381 = vst.msk [vmem:[%s2 + $0x50] sm:$0xff] %vm370, %v327
  %382 = vst.msk [vmem:[%s2 + $0x58] sm:$0xff] %vm370, %v329
  %383 = vst.msk [vmem:[%s2 + $0x60] sm:$0xff] %vm370, %v331
  %384 = vst.msk [vmem:[%s2 + $0x68] sm:$0xff] %vm370, %v333
  %385 = vst.msk [vmem:[%s2 + $0x70] sm:$0xff] %vm370, %v335
  %386 = vst.msk [vmem:[%s2 + $0x78] sm:$0xff] %vm370, %v337
  %387 = vst.msk [vmem:[%s2 + $0x80] sm:$0xff] %vm370, %v339
  %388 = vst.msk [vmem:[%s2 + $0x88] sm:$0xff] %vm370, %v341
  %389 = vst.msk [vmem:[%s2 + $0x90] sm:$0xff] %vm370, %v343
  %390 = vst.msk [vmem:[%s2 + $0x98] sm:$0xff] %vm370, %v345
  %391 = vst.msk [vmem:[%s2 + $0xa0] sm:$0xff] %vm370, %v347
  %392 = vst.msk [vmem:[%s2 + $0xa8] sm:$0xff] %vm370, %v349
  %393 = vst.msk [vmem:[%s2 + $0xb0] sm:$0xff] %vm370, %v351
  %394 = vst.msk [vmem:[%s2 + $0xb8] sm:$0xff] %vm370, %v353
  %395 = vst.msk [vmem:[%s2 + $0xc0] sm:$0xff] %vm370, %v355
  %396 = vst.msk [vmem:[%s2 + $0xc8] sm:$0xff] %vm370, %v357
  %397 = vst.msk [vmem:[%s2 + $0xd0] sm:$0xff] %vm370, %v359
  %398 = vst.msk [vmem:[%s2 + $0xd8] sm:$0xff] %vm370, %v361
  %399 = vst.msk [vmem:[%s2 + $0xe0] sm:$0xff] %vm370, %v363
  %400 = vst.msk [vmem:[%s2 + $0xe8] sm:$0xff] %vm370, %v365
  %401 = vst.msk [vmem:[%s2 + $0xf0] sm:$0xff] %vm370, %v367
  %402 = vst.msk [vmem:[%s2 + $0xf8] sm:$0xff] %vm370, %v369
  // Predicated region
  $region10: #{tpu_custom_call.1} parent=0 // pred_check
    _
  $region11: #{tpu_custom_call.1} parent=0 // pred_check_branch
    %404 = sbr.rel (0) target = $region13
  $region12: #{tpu_custom_call.1} parent=0 // pred_region
    _
  $region13: #{tpu_custom_call.1} parent=0 // pred_fallthru
    _
  // Predicated region
  $region14: #{tpu_custom_call.1} parent=0 // pred_check
    _
  $region15: #{tpu_custom_call.1} parent=0 // pred_check_branch
    %406 = sbr.rel (0) target = $region17
  $region16: #{tpu_custom_call.1} parent=0 // pred_region
    _
  $region17: #{tpu_custom_call.1} parent=0 // pred_fallthru
    _

</llo_original>
